<compile_context>
chip_gen: v7x
topology: tpu7x:2x2x1
jax: 0.10.0
libtpu: 0.0.40
codegen_flags: <defaults>
</compile_context>

<pallas_src>
import jax
import jax.numpy as jnp
import numpy as np
from jax.experimental import pallas as pl
from jax.experimental.pallas import tpu as pltpu

LANE = 128
SUB = 8


def _make_kernel(padded, acc_sub):
    """Kernel factory; `padded`/`acc_sub` are static (trace-time) choices."""

    def kernel(l_ref, t_ref, ce_ref, inter_ref, union_ref):
        # l_ref: (Bb, 2, TR, 128) logits (native dtype)
        # t_ref: (Bb, TR, 128) int8 labels ({0,1}; -1 marks wrapper padding)
        # outputs: (Bb, acc_sub, 128) f32 per-batch lane-dense partial sums.
        s = pl.program_id(1)

        @pl.when(s == 0)
        def _():
            ce_ref[...] = jnp.zeros_like(ce_ref)
            inter_ref[...] = jnp.zeros_like(inter_ref)
            union_ref[...] = jnp.zeros_like(union_ref)

        l0 = l_ref[:, 0, :, :].astype(jnp.float32)     # (Bb, TR, 128)
        l1 = l_ref[:, 1, :, :].astype(jnp.float32)     # (Bb, TR, 128)
        ti = t_ref[...].astype(jnp.int32)              # cheap unpack; keeps
        pos = ti == 1                                  # masks in (8,128) layout

        # 2-class CE and softmax(class 1) from one logit margin d = l1 - l0:
        #   CE(y=1) = softplus(-d), CE(y=0) = softplus(d)
        #   softplus(z) = max(z, 0) + log(1 + exp(-|z|)),  |z| == |d|
        #   p1 = sigmoid(d) = 1/(1+e)  if d >= 0 else 1 - 1/(1+e),  e = exp(-|d|)
        d = l1 - l0
        z = jnp.where(pos, -d, d)
        e = jnp.exp(-jnp.abs(d))                       # one exp / pixel (EUP)
        one_plus_e = 1.0 + e
        ce_pix = jnp.maximum(z, 0.0) + jnp.log(one_plus_e)
        r = pl.reciprocal(one_plus_e, approx=True)     # EUP slot, VALU freed
        r = r * (2.0 - one_plus_e * r)                 # one Newton step (f32 acc)
        p1 = jnp.where(d >= 0.0, r, 1.0 - r)

        tf = jnp.where(pos, 1.0, 0.0)                  # avoid int->f32 convert
        inter_pix = jnp.where(pos, p1, 0.0)
        union_pix = p1 + tf
        if padded:
            valid = ti >= 0                            # padding wrote -1
            ce_pix = jnp.where(valid, ce_pix, 0.0)
            union_pix = jnp.where(valid, union_pix, 0.0)

        bb, tr, _ = ce_pix.shape
        if acc_sub == SUB:
            # Vreg-aligned adds only (no cross-lane XLU reduce in the loop).
            def tile_sum(x):
                return x.reshape(bb, tr // SUB, SUB, LANE).sum(axis=1)
        else:
            # Tiny planes (TR not a multiple of 8): single sublane reduce.
            def tile_sum(x):
                return jnp.sum(x, axis=1, keepdims=True)

        ce_ref[...] += tile_sum(ce_pix)
        inter_ref[...] += tile_sum(inter_pix)
        union_ref[...] += tile_sum(union_pix)

    return kernel


def _pick_tile_rows(n_rows, max_tile=2048, align=32):
    """Spatial row tile: whole plane if it fits, else the largest
    multiple-of-`align` divisor <= max_tile, else a capped multiple-of-`align`
    tile (the ragged tail is padded by the wrapper and masked in-kernel)."""
    if n_rows <= max_tile:
        return n_rows
    for t in range(max_tile, align - 1, -align):
        if n_rows % t == 0:
            return t
    n_chunks = -(-n_rows // max_tile)
    t = -(-n_rows // n_chunks)
    return -(-t // align) * align


def _pick_batch_block(B, step_bytes_per_batch, target_bytes=2 << 20):
    """Smallest divisor of B whose block moves >= ~target_bytes per grid step,
    capped so the (parallel) batch axis keeps >= 2 steps when B >= 2."""
    bb = B
    for d in range(1, B + 1):
        if B % d == 0 and d * step_bytes_per_batch >= target_bytes:
            bb = d
            break
    if B >= 2:
        bb = min(bb, B // 2)
        while B % bb:
            bb -= 1
    return max(bb, 1)


def combined_loss(logits, targets, ce_weight=0.5):
    """logits: (B, 2, H, W) float32/bfloat16; targets: (B, H, W) {0,1} labels.

    Returns ce_weight * CE + (1 - ce_weight) * DiceLoss, matching the PyTorch
    CombinedLoss.forward (class_weights=None).
    """
    B, C, H, W = logits.shape
    assert C == 2, "CombinedLoss kernel is specialized to 2 classes"
    HW = H * W

    n_rows = pl.cdiv(HW, LANE)
    tile_rows = _pick_tile_rows(n_rows)
    n_tiles = pl.cdiv(n_rows, tile_rows)
    n_rows_pad = n_tiles * tile_rows
    pad = n_rows_pad * LANE - HW
    padded = pad > 0
    acc_sub = SUB if tile_rows % SUB == 0 else 1

    # Keep native logits dtype (bf16 is cast to f32 only inside the kernel).
    lf = logits.reshape(B, C, HW)
    # NOTE: int8 targets are exact only for labels in {0, 1} (binary seg spec).
    if targets.dtype not in (jnp.int8, jnp.uint8):
        targets = targets.astype(jnp.int8)
    tf8 = targets.reshape(B, HW)
    if padded:
        lf = jnp.pad(lf, ((0, 0), (0, 0), (0, pad)))
        tf8 = jnp.pad(tf8, ((0, 0), (0, pad)), constant_values=-1)
    l = lf.reshape(B, C, n_rows_pad, LANE)
    t = tf8.reshape(B, n_rows_pad, LANE)

    itemsize = np.dtype(logits.dtype).itemsize
    step_bytes_per_batch = tile_rows * LANE * (2 * itemsize + 1)
    bb = _pick_batch_block(B, step_bytes_per_batch)

    acc_shape = jax.ShapeDtypeStruct((B, acc_sub, LANE), jnp.float32)
    acc_spec = pl.BlockSpec((bb, acc_sub, LANE), lambda b, s: (b, 0, 0))

    ce_p, inter_p, union_p = pl.pallas_call(
        _make_kernel(padded, acc_sub),
        out_shape=(acc_shape, acc_shape, acc_shape),
        grid_spec=pltpu.PrefetchScalarGridSpec(
            num_scalar_prefetch=0,
            grid=(B // bb, n_tiles),                    # spatial reduction last
            in_specs=[
                pl.BlockSpec((bb, C, tile_rows, LANE), lambda b, s: (b, 0, s, 0)),
                pl.BlockSpec((bb, tile_rows, LANE), lambda b, s: (b, s, 0)),
            ],
            out_specs=[acc_spec, acc_spec, acc_spec],
        ),
        compiler_params=pltpu.CompilerParams(
            # batch axis parallel (both TensorCores on v7x); reduction serial.
            dimension_semantics=("parallel", "arbitrary")),
    )(l, t)

    # Tiny lane/sublane finish outside the kernel.
    ce_loss = jnp.sum(ce_p) / float(B * HW)
    inter_b = jnp.sum(inter_p.reshape(B, -1), axis=1)
    union_b = jnp.sum(union_p.reshape(B, -1), axis=1)
    dice = (2.0 * inter_b + 1e-6) / (union_b + 1e-6)
    dice_loss = 1.0 - jnp.mean(dice)
    return ce_weight * ce_loss + (1.0 - ce_weight) * dice_loss


def _combined_loss_ref(logits, targets, ce_weight=0.5):
    """Pure-JAX reference mirroring the PyTorch forward."""
    logits = logits.astype(jnp.float32)
    ti = targets.astype(jnp.int32)
    logp = jax.nn.log_softmax(logits, axis=1)            # (B, 2, H, W)
    ce = -jnp.take_along_axis(logp, ti[:, None, :, :], axis=1)[:, 0]
    ce_loss = jnp.mean(ce)
    probs = jax.nn.softmax(logits, axis=1)[:, 1, :, :]
    tf = targets.astype(jnp.float32)
    inter = jnp.sum(probs * tf, axis=(1, 2))
    union = jnp.sum(probs + tf, axis=(1, 2))
    dice = (2.0 * inter + 1e-6) / (union + 1e-6)
    dice_loss = 1.0 - jnp.mean(dice)
    return ce_weight * ce_loss + (1.0 - ce_weight) * dice_loss


def _check(key, B, H, W, tgt_dtype=jnp.int8):
    k1, k2 = jax.random.split(key)
    logits = jax.random.normal(k1, (B, 2, H, W), dtype=jnp.float32)
    targets = (jax.random.uniform(k2, (B, H, W)) > 0.5).astype(tgt_dtype)
    loss = jax.block_until_ready(combined_loss(logits, targets, ce_weight=0.5))
    ref = _combined_loss_ref(logits, targets, ce_weight=0.5)
    np.testing.assert_allclose(np.asarray(loss), np.asarray(ref),
                               rtol=1e-4, atol=1e-5)


if __name__ == "__main__":
    key = jax.random.PRNGKey(0)
    k1, k2, k3, k4 = jax.random.split(key, 4)

    _check(k1, B=2, H=16, W=16)                  # small smoke test
    _check(k2, B=8, H=64, W=64)                  # batch-folding path (Bb > 1)
    _check(k3, B=2, H=20, W=20)                  # HW % 128 != 0 -> pad + mask
    _check(k4, B=2, H=224, W=224, tgt_dtype=jnp.int32)  # spec-sized, fast path

    print("KERNEL_OK")
</pallas_src>

<mosaic_0001>
module attributes {stable_mosaic.version = 11 : i64} {
  func.func @kernel(%arg0: i32, %arg1: i32, %arg2: memref<1x2x2x128xf32, #tpu.memory_space<vmem>>, %arg3: memref<1x2x128xi8, #tpu.memory_space<vmem>>, %arg4: memref<1x1x128xf32, #tpu.memory_space<vmem>>, %arg5: memref<1x1x128xf32, #tpu.memory_space<vmem>>, %arg6: memref<1x1x128xf32, #tpu.memory_space<vmem>>) attributes {dimension_semantics = [#tpu.dimension_semantics<parallel>, #tpu.dimension_semantics<arbitrary>], iteration_bounds = array<i64: 2, 1>, scalar_prefetch = 0 : i64, scratch_operands = 0 : i64, tpu.core_type = #tpu.core_type<tc>, window_params = [{transform_indices = @transform_0, window_bounds = array<i64: 1, 2, 2, 128>}, {transform_indices = @transform_1, window_bounds = array<i64: 1, 2, 128>}, {transform_indices = @transform_2, window_bounds = array<i64: 1, 1, 128>}, {transform_indices = @transform_3, window_bounds = array<i64: 1, 1, 128>}, {transform_indices = @transform_4, window_bounds = array<i64: 1, 1, 128>}]} {
    %c0_i32 = arith.constant 0 : i32
    %0 = arith.cmpi eq, %arg1, %c0_i32 : i32
    %1 = arith.extui %0 : i1 to i32
    %c0_i32_0 = arith.constant 0 : i32
    %2 = arith.cmpi ne, %1, %c0_i32_0 : i32
    scf.if %2 {
      %cst_40 = arith.constant 0.000000e+00 : f32
      %56 = vector.broadcast %cst_40 : f32 to vector<1x1x128xf32>
      %c0_41 = arith.constant 0 : index
      %c0_42 = arith.constant 0 : index
      %c0_43 = arith.constant 0 : index
      %57 = vector.load %arg4[%c0_41, %c0_42, %c0_43] : memref<1x1x128xf32, #tpu.memory_space<vmem>>, vector<1x1x128xf32>
      tpu.vector_store %arg4[%c0_41, %c0_42, %c0_43], %56 {strides = array<i32>} : memref<1x1x128xf32, #tpu.memory_space<vmem>>, vector<1x1x128xf32>,
      %cst_44 = arith.constant 0.000000e+00 : f32
      %58 = vector.broadcast %cst_44 : f32 to vector<1x1x128xf32>
      %c0_45 = arith.constant 0 : index
      %c0_46 = arith.constant 0 : index
      %c0_47 = arith.constant 0 : index
      %59 = vector.load %arg5[%c0_45, %c0_46, %c0_47] : memref<1x1x128xf32, #tpu.memory_space<vmem>>, vector<1x1x128xf32>
      tpu.vector_store %arg5[%c0_45, %c0_46, %c0_47], %58 {strides = array<i32>} : memref<1x1x128xf32, #tpu.memory_space<vmem>>, vector<1x1x128xf32>,
      %cst_48 = arith.constant 0.000000e+00 : f32
      %60 = vector.broadcast %cst_48 : f32 to vector<1x1x128xf32>
      %c0_49 = arith.constant 0 : index
      %c0_50 = arith.constant 0 : index
      %c0_51 = arith.constant 0 : index
      %61 = vector.load %arg6[%c0_49, %c0_50, %c0_51] : memref<1x1x128xf32, #tpu.memory_space<vmem>>, vector<1x1x128xf32>
      tpu.vector_store %arg6[%c0_49, %c0_50, %c0_51], %60 {strides = array<i32>} : memref<1x1x128xf32, #tpu.memory_space<vmem>>, vector<1x1x128xf32>,
    } else {
    }
    %c0 = arith.constant 0 : index
    %c0_1 = arith.constant 0 : index
    %c0_2 = arith.constant 0 : index
    %c0_3 = arith.constant 0 : index
    %3 = vector.load %arg2[%c0, %c0_1, %c0_2, %c0_3] : memref<1x2x2x128xf32, #tpu.memory_space<vmem>>, vector<1x1x2x128xf32>
    %4 = vector.shape_cast %3 : vector<1x1x2x128xf32> to vector<1x2x128xf32>
    %c0_4 = arith.constant 0 : index
    %c1 = arith.constant 1 : index
    %c0_5 = arith.constant 0 : index
    %c0_6 = arith.constant 0 : index
    %5 = vector.load %arg2[%c0_4, %c1, %c0_5, %c0_6] : memref<1x2x2x128xf32, #tpu.memory_space<vmem>>, vector<1x1x2x128xf32>
    %6 = vector.shape_cast %5 : vector<1x1x2x128xf32> to vector<1x2x128xf32>
    %c0_7 = arith.constant 0 : index
    %c0_8 = arith.constant 0 : index
    %c0_9 = arith.constant 0 : index
    %7 = vector.load %arg3[%c0_7, %c0_8, %c0_9] : memref<1x2x128xi8, #tpu.memory_space<vmem>>, vector<1x2x128xi8>
    %8 = arith.extsi %7 : vector<1x2x128xi8> to vector<1x2x128xi32>
    %c1_i32 = arith.constant 1 : i32
    %9 = vector.broadcast %c1_i32 : i32 to vector<1x2x128xi32>
    %10 = arith.cmpi eq, %8, %9 : vector<1x2x128xi32>
    %11 = arith.subf %6, %4 : vector<1x2x128xf32>
    %cst = arith.constant 0.000000e+00 : f32
    %12 = vector.broadcast %cst : f32 to vector<1x2x128xf32>
    %13 = arith.subf %12, %11 : vector<1x2x128xf32>
    %14 = arith.select %10, %13, %11 : vector<1x2x128xi1>, vector<1x2x128xf32>
    %15 = math.absf %11 : vector<1x2x128xf32>
    %cst_10 = arith.constant 0.000000e+00 : f32
    %16 = vector.broadcast %cst_10 : f32 to vector<1x2x128xf32>
    %17 = arith.subf %16, %15 : vector<1x2x128xf32>
    %18 = math.exp %17 : vector<1x2x128xf32>
    %cst_11 = arith.constant 1.000000e+00 : f32
    %19 = vector.broadcast %cst_11 : f32 to vector<1x2x128xf32>
    %20 = arith.addf %19, %18 : vector<1x2x128xf32>
    %cst_12 = arith.constant 0.000000e+00 : f32
    %21 = vector.broadcast %cst_12 : f32 to vector<1x2x128xf32>
    %22 = arith.maximumf %14, %21 : vector<1x2x128xf32>
    %23 = math.log %20 : vector<1x2x128xf32>
    %24 = arith.addf %22, %23 : vector<1x2x128xf32>
    %25 = tpu.reciprocal %20 {approx = true} : vector<1x2x128xf32> -> vector<1x2x128xf32>
    %26 = arith.mulf %20, %25 : vector<1x2x128xf32>
    %cst_13 = arith.constant 2.000000e+00 : f32
    %27 = vector.broadcast %cst_13 : f32 to vector<1x2x128xf32>
    %28 = arith.subf %27, %26 : vector<1x2x128xf32>
    %29 = arith.mulf %25, %28 : vector<1x2x128xf32>
    %cst_14 = arith.constant 0.000000e+00 : f32
    %30 = vector.broadcast %cst_14 : f32 to vector<1x2x128xf32>
    %31 = arith.cmpf oge, %11, %30 : vector<1x2x128xf32>
    %cst_15 = arith.constant 1.000000e+00 : f32
    %32 = vector.broadcast %cst_15 : f32 to vector<1x2x128xf32>
    %33 = arith.subf %32, %29 : vector<1x2x128xf32>
    %34 = arith.select %31, %29, %33 : vector<1x2x128xi1>, vector<1x2x128xf32>
    %cst_16 = arith.constant 1.000000e+00 : f32
    %cst_17 = arith.constant 0.000000e+00 : f32
    %35 = vector.broadcast %cst_16 : f32 to vector<1x2x128xf32>
    %36 = vector.broadcast %cst_17 : f32 to vector<1x2x128xf32>
    %37 = arith.select %10, %35, %36 : vector<1x2x128xi1>, vector<1x2x128xf32>
    %cst_18 = arith.constant 0.000000e+00 : f32
    %38 = vector.broadcast %cst_18 : f32 to vector<1x2x128xf32>
    %39 = arith.select %10, %34, %38 : vector<1x2x128xi1>, vector<1x2x128xf32>
    %40 = arith.addf %34, %37 : vector<1x2x128xf32>
    %c0_19 = arith.constant 0 : index
    %c0_20 = arith.constant 0 : index
    %c0_21 = arith.constant 0 : index
    %41 = vector.load %arg4[%c0_19, %c0_20, %c0_21] : memref<1x1x128xf32, #tpu.memory_space<vmem>>, vector<1x1x128xf32>
    %cst_22 = arith.constant dense<0.000000e+00> : vector<1x128xf32>
    %42 = vector.multi_reduction <add>, %24, %cst_22 [1] : vector<1x2x128xf32> to vector<1x128xf32>
    %43 = vector.shape_cast %42 : vector<1x128xf32> to vector<1x1x128xf32>
    %44 = arith.addf %41, %43 : vector<1x1x128xf32>
    %c0_23 = arith.constant 0 : index
    %c0_24 = arith.constant 0 : index
    %c0_25 = arith.constant 0 : index
    %45 = vector.load %arg4[%c0_23, %c0_24, %c0_25] : memref<1x1x128xf32, #tpu.memory_space<vmem>>, vector<1x1x128xf32>
    tpu.vector_store %arg4[%c0_23, %c0_24, %c0_25], %44 {strides = array<i32>} : memref<1x1x128xf32, #tpu.memory_space<vmem>>, vector<1x1x128xf32>,
    %c0_26 = arith.constant 0 : index
    %c0_27 = arith.constant 0 : index
    %c0_28 = arith.constant 0 : index
    %46 = vector.load %arg5[%c0_26, %c0_27, %c0_28] : memref<1x1x128xf32, #tpu.memory_space<vmem>>, vector<1x1x128xf32>
    %cst_29 = arith.constant dense<0.000000e+00> : vector<1x128xf32>
    %47 = vector.multi_reduction <add>, %39, %cst_29 [1] : vector<1x2x128xf32> to vector<1x128xf32>
    %48 = vector.shape_cast %47 : vector<1x128xf32> to vector<1x1x128xf32>
    %49 = arith.addf %46, %48 : vector<1x1x128xf32>
    %c0_30 = arith.constant 0 : index
    %c0_31 = arith.constant 0 : index
    %c0_32 = arith.constant 0 : index
    %50 = vector.load %arg5[%c0_30, %c0_31, %c0_32] : memref<1x1x128xf32, #tpu.memory_space<vmem>>, vector<1x1x128xf32>
    tpu.vector_store %arg5[%c0_30, %c0_31, %c0_32], %49 {strides = array<i32>} : memref<1x1x128xf32, #tpu.memory_space<vmem>>, vector<1x1x128xf32>,
    %c0_33 = arith.constant 0 : index
    %c0_34 = arith.constant 0 : index
    %c0_35 = arith.constant 0 : index
    %51 = vector.load %arg6[%c0_33, %c0_34, %c0_35] : memref<1x1x128xf32, #tpu.memory_space<vmem>>, vector<1x1x128xf32>
    %cst_36 = arith.constant dense<0.000000e+00> : vector<1x128xf32>
    %52 = vector.multi_reduction <add>, %40, %cst_36 [1] : vector<1x2x128xf32> to vector<1x128xf32>
    %53 = vector.shape_cast %52 : vector<1x128xf32> to vector<1x1x128xf32>
    %54 = arith.addf %51, %53 : vector<1x1x128xf32>
    %c0_37 = arith.constant 0 : index
    %c0_38 = arith.constant 0 : index
    %c0_39 = arith.constant 0 : index
    %55 = vector.load %arg6[%c0_37, %c0_38, %c0_39] : memref<1x1x128xf32, #tpu.memory_space<vmem>>, vector<1x1x128xf32>
    tpu.vector_store %arg6[%c0_37, %c0_38, %c0_39], %54 {strides = array<i32>} : memref<1x1x128xf32, #tpu.memory_space<vmem>>, vector<1x1x128xf32>,
    return
  }
  func.func @transform_0(%arg0: i32, %arg1: i32) -> (i32, i32, i32, i32) {
    %c0_i32 = arith.constant 0 : i32
    %c0_i32_0 = arith.constant 0 : i32
    %c0_i32_1 = arith.constant 0 : i32
    return %arg0, %c0_i32, %arg1, %c0_i32_0 : i32, i32, i32, i32
  }
  func.func @transform_1(%arg0: i32, %arg1: i32) -> (i32, i32, i32) {
    %c0_i32 = arith.constant 0 : i32
    %c0_i32_0 = arith.constant 0 : i32
    return %arg0, %arg1, %c0_i32 : i32, i32, i32
  }
  func.func @transform_2(%arg0: i32, %arg1: i32) -> (i32, i32, i32) {
    %c0_i32 = arith.constant 0 : i32
    %c0_i32_0 = arith.constant 0 : i32
    %c0_i32_1 = arith.constant 0 : i32
    return %arg0, %c0_i32, %c0_i32_0 : i32, i32, i32
  }
  func.func @transform_3(%arg0: i32, %arg1: i32) -> (i32, i32, i32) {
    %c0_i32 = arith.constant 0 : i32
    %c0_i32_0 = arith.constant 0 : i32
    %c0_i32_1 = arith.constant 0 : i32
    return %arg0, %c0_i32, %c0_i32_0 : i32, i32, i32
  }
  func.func @transform_4(%arg0: i32, %arg1: i32) -> (i32, i32, i32) {
    %c0_i32 = arith.constant 0 : i32
    %c0_i32_0 = arith.constant 0 : i32
    %c0_i32_1 = arith.constant 0 : i32
    return %arg0, %c0_i32, %c0_i32_0 : i32, i32, i32
  }
}

</mosaic_0001>

<llo_original>
// kernel: tpu_custom_call.1
$region0: #{tpu_custom_call.1}
  #allocation0 [shape = 'u32[]', space=smem, size = 0x4, offset = 0x4, fixed_abs, tag = 'smem constant byte address 0x4 - core index']
  #allocation1 [shape = 'u32[144,128]{1,0:T(1,128)}', space=vmem, size = 0x12000, scoped, tag = 'internal scratch']
  %s0 = inlined_call_operand.hbm [shape: f32[2,2,2,128], index: 0, kind: input, shape index: {}]
  %s1 = inlined_call_operand.vmem [shape: s8[2,2,128], index: 1, kind: input, shape index: {}]
  %s2 = inlined_call_operand.hbm [shape: f32[2,1,128], index: 2, kind: output, shape index: {0}]
  %s3 = inlined_call_operand.hbm [shape: f32[2,1,128], index: 3, kind: output, shape index: {1}]
  %s4 = inlined_call_operand.hbm [shape: f32[2,1,128], index: 4, kind: output, shape index: {2}]
  %5 = xla_tuple %s2, %s3, %s4
  %s6 = sld [smem:[#allocation0]]
  $region65: #{tpu_custom_call.1} parent=0
    _
  %s8 = ssub.s32 1, %s6
  %s9 = scalar_select 0, %s8, %s6
  $region1: #{tpu_custom_call.1} parent=0
    #allocation2 [shape = 'u8[4096]{0}', space=vmem, size = 0x1000, scoped, tag = 'input window, operand 0']
    #allocation3 [shape = 's32[2]{0}', space=sflag, size = 0x8, scoped, tag = 'scoped memory for tpu_custom_call.1']
    #allocation4 [shape = 's32[2]{0}', space=sflag, size = 0x8, scoped, tag = 'scoped memory for tpu_custom_call.1']
    #allocation5 [shape = 'u8[1024]{0}', space=vmem, size = 0x400, scoped, tag = 'output window, operand 0']
    #allocation6 [shape = 'u8[1024]{0}', space=vmem, size = 0x400, scoped, tag = 'output window, operand 1']
    #allocation7 [shape = 's32[2]{0}', space=sflag, size = 0x8, scoped, tag = 'scoped memory for tpu_custom_call.1']
    #allocation8 [shape = 'u8[1024]{0}', space=vmem, size = 0x400, scoped, tag = 'output window, operand 2']
    %10 = vsyncpa [#allocation3], 0
    %s11 = scalar_lea.sflag [#allocation3], 1
    %12 = vsyncpa %s11, 0
    %13 = vsyncpa [#allocation4], 0
    %s14 = scalar_lea.sflag [#allocation4], 1
    %15 = vsyncpa %s14, 0
    %16 = vsyncpa [#allocation7], 0
    %s17 = scalar_lea.sflag [#allocation7], 1
    %18 = vsyncpa %s17, 0
    loop: start=0, step=1, limit=4
    $region2: #{tpu_custom_call.1} parent=1 // loop_pre_header
      _
    $region3: #{tpu_custom_call.1} parent=1 // loop_header
      %s20 = sphi 0, %s24
      %p21 = scmp.ge.s32.totalorder %s20, 4
      %s27 = sphi 0, %s39
      %s28 = sphi 0, %s35
      %s29 = sphi 0, %s27
      %s30 = sphi 0, %s28
      %s31 = sphi 0, %s29
      %s32 = sphi 0, %s30
      %s44 = sphi 0, %s46
      %s47 = sphi 0, %s44
      %s48 = sphi 0, %s47
      %s64 = sphi 0, %s48
      %s72 = sphi 0, %s74
      %s75 = sphi 0, %s72
      %s76 = sphi 0, %s75
      %s92 = sphi 0, %s76
      %s98 = sphi 0, %s100
      %s101 = sphi 0, %s98
      %s102 = sphi 0, %s101
      %s118 = sphi 0, %s102
      %s124 = sphi 0, %s126
      %s127 = sphi 0, %s124
      %s128 = sphi 0, %s127
      %s144 = sphi 0, %s128
      %s150 = sphi 0, %s152
      %s153 = sphi 0, %s150
      %s154 = sphi 0, %s153
      %s170 = sphi 0, %s154
    $region4: #{tpu_custom_call.1} parent=1 // loop_header_branch
      %23 = sbr.rel (%p21) target = $region8
    $region5: #{tpu_custom_call.1} parent=1 // loop_body
      %s25 = ssub.s32 %s20, 1
      %s26 = ssub.s32 %s20, 2
      %s33 = sadd.s32 1, %s28
      %p34 = scmp.ge.s32.totalorder %s33, 1
      %s35 = scalar_select %p34, 0, %s33
      %s36 = sadd.s32 1, %s27
      %s37 = scalar_select %p34, %s36, %s27
      %p38 = scmp.ge.s32.totalorder %s37, 2
      %s39 = scalar_select %p38, 0, %s37
      %s40 = ssub.s32 %s27, %s39
      %s41 = ssub.s32 %s28, %s35
      %s42 = sor.u32 %s40, %s41
      %p43 = scmp.eq.s32.totalorder %s42, 0
      %s45 = sadd.s32 %s44, 1
      %s46 = scalar_select %p43, %s44, %s45
      %p49 = pneg %p43
      %p50 = scmp.eq.s32.totalorder %s20, 1
      %p51 = por %p49, %p50
      %p52 = scmp.ne.s32.totalorder %s44, %s47
      %p53 = scmp.eq.s32.totalorder %s20, 0
      %p54 = por %p52, %p53
      %p55 = scmp.ne.s32.totalorder %s44, %s47
      %p56 = scmp.eq.s32.totalorder %s25, 1
      %p57 = por %p55, %p56
      %p58 = scmp.ne.s32.totalorder %s47, %s48
      %p59 = scmp.eq.s32.totalorder %s25, 0
      %p60 = por %p58, %p59
      %p61 = scmp.ne.s32.totalorder %s47, %s48
      %p62 = scmp.eq.s32.totalorder %s26, 1
      %p63 = por %p61, %p62
      %p65 = scmp.ne.s32.totalorder %s48, %s64
      %p66 = scmp.eq.s32.totalorder %s26, 0
      %p67 = por %p65, %p66
      %s68 = ssub.s32 %s27, %s39
      %s69 = ssub.s32 %s28, %s35
      %s70 = sor.u32 %s68, %s69
      %p71 = scmp.eq.s32.totalorder %s70, 0
      %s73 = sadd.s32 %s72, 1
      %s74 = scalar_select %p71, %s72, %s73
      %p77 = pneg %p71
      %p78 = scmp.eq.s32.totalorder %s20, 1
      %p79 = por %p77, %p78
      %p80 = scmp.ne.s32.totalorder %s72, %s75
      %p81 = scmp.eq.s32.totalorder %s20, 0
      %p82 = por %p80, %p81
      %p83 = scmp.ne.s32.totalorder %s72, %s75
      %p84 = scmp.eq.s32.totalorder %s25, 1
      %p85 = por %p83, %p84
      %p86 = scmp.ne.s32.totalorder %s75, %s76
      %p87 = scmp.eq.s32.totalorder %s25, 0
      %p88 = por %p86, %p87
      %p89 = scmp.ne.s32.totalorder %s75, %s76
      %p90 = scmp.eq.s32.totalorder %s26, 1
      %p91 = por %p89, %p90
      %p93 = scmp.ne.s32.totalorder %s76, %s92
      %p94 = scmp.eq.s32.totalorder %s26, 0
      %p95 = por %p93, %p94
      %s96 = ssub.s32 %s27, %s39
      %p97 = scmp.eq.s32.totalorder %s96, 0
      %s99 = sadd.s32 %s98, 1
      %s100 = scalar_select %p97, %s98, %s99
      %p103 = pneg %p97
      %p104 = scmp.eq.s32.totalorder %s20, 1
      %p105 = por %p103, %p104
      %p106 = scmp.ne.s32.totalorder %s98, %s101
      %p107 = scmp.eq.s32.totalorder %s20, 0
      %p108 = por %p106, %p107
      %p109 = scmp.ne.s32.totalorder %s98, %s101
      %p110 = scmp.eq.s32.totalorder %s25, 1
      %p111 = por %p109, %p110
      %p112 = scmp.ne.s32.totalorder %s101, %s102
      %p113 = scmp.eq.s32.totalorder %s25, 0
      %p114 = por %p112, %p113
      %p115 = scmp.ne.s32.totalorder %s101, %s102
      %p116 = scmp.eq.s32.totalorder %s26, 1
      %p117 = por %p115, %p116
      %p119 = scmp.ne.s32.totalorder %s102, %s118
      %p120 = scmp.eq.s32.totalorder %s26, 0
      %p121 = por %p119, %p120
      %s122 = ssub.s32 %s27, %s39
      %p123 = scmp.eq.s32.totalorder %s122, 0
      %s125 = sadd.s32 %s124, 1
      %s126 = scalar_select %p123, %s124, %s125
      %p129 = pneg %p123
      %p130 = scmp.eq.s32.totalorder %s20, 1
      %p131 = por %p129, %p130
      %p132 = scmp.ne.s32.totalorder %s124, %s127
      %p133 = scmp.eq.s32.totalorder %s20, 0
      %p134 = por %p132, %p133
      %p135 = scmp.ne.s32.totalorder %s124, %s127
      %p136 = scmp.eq.s32.totalorder %s25, 1
      %p137 = por %p135, %p136
      %p138 = scmp.ne.s32.totalorder %s127, %s128
      %p139 = scmp.eq.s32.totalorder %s25, 0
      %p140 = por %p138, %p139
      %p141 = scmp.ne.s32.totalorder %s127, %s128
      %p142 = scmp.eq.s32.totalorder %s26, 1
      %p143 = por %p141, %p142
      %p145 = scmp.ne.s32.totalorder %s128, %s144
      %p146 = scmp.eq.s32.totalorder %s26, 0
      %p147 = por %p145, %p146
      %s148 = ssub.s32 %s27, %s39
      %p149 = scmp.eq.s32.totalorder %s148, 0
      %s151 = sadd.s32 %s150, 1
      %s152 = scalar_select %p149, %s150, %s151
      %p155 = pneg %p149
      %p156 = scmp.eq.s32.totalorder %s20, 1
      %p157 = por %p155, %p156
      %p158 = scmp.ne.s32.totalorder %s150, %s153
      %p159 = scmp.eq.s32.totalorder %s20, 0
      %p160 = por %p158, %p159
      %p161 = scmp.ne.s32.totalorder %s150, %s153
      %p162 = scmp.eq.s32.totalorder %s25, 1
      %p163 = por %p161, %p162
      %p164 = scmp.ne.s32.totalorder %s153, %s154
      %p165 = scmp.eq.s32.totalorder %s25, 0
      %p166 = por %p164, %p165
      %p167 = scmp.ne.s32.totalorder %s153, %s154
      %p168 = scmp.eq.s32.totalorder %s26, 1
      %p169 = por %p167, %p168
      %p171 = scmp.ne.s32.totalorder %s154, %s170
      %p172 = scmp.eq.s32.totalorder %s26, 0
      %p173 = por %p171, %p172
      %p174 = scmp.le.s32.totalorder 1, %s20
      %p175 = scmp.lt.s32.totalorder %s20, 3
      %p176 = pnand %p174, %p175
      %p177 = pneg %p176
      // Predicated region
      $region9: #{tpu_custom_call.1} parent=5 // pred_check
        _
      $region10: #{tpu_custom_call.1} parent=5 // pred_check_branch
        %179 = sbr.rel (%p176) target = $region12
      $region11: #{tpu_custom_call.1} parent=5 // pred_region
        %s180 = ssub.s32 %s20, 1
      $region12: #{tpu_custom_call.1} parent=5 // pred_fallthru
        _
      %p181 = scmp.lt.s32.totalorder %s20, 2
      // Predicated region
      $region13: #{tpu_custom_call.1} parent=5 // pred_check
        %p182 = pneg %p181
      $region14: #{tpu_custom_call.1} parent=5 // pred_check_branch
        %184 = sbr.rel (%p182) target = $region16
      $region15: #{tpu_custom_call.1} parent=5 // pred_region
        // Predicated region
        $region17: #{tpu_custom_call.1} parent=15 // pred_check
          %p185 = pneg %p54
        $region18: #{tpu_custom_call.1} parent=15 // pred_check_branch
          %187 = sbr.rel (%p185) target = $region20
        $region19: #{tpu_custom_call.1} parent=15 // pred_region
          %s188 = sand.u32 %s44, 1
          %s189 = scalar_lea.sflag [#allocation3], %s188
          %s190 = sand.u32 %s44, 1
          %s191 = smul.addr %s190, 4
          %s192 = scalar_lea.vmem [#allocation2], %s191
          %s194 = ssub.s32 64, 64
          %195 = vsyncadd %s189, %s194
          %s196 = smul.addr %s27, 2
          %s197 = sadd.s32 %s28, %s196
          %s198 = smul.addr %s197, 32
          %s199 = scalar_lea.hbm %s0, %s198
          %s200 = sshll.u32 %s192, 4
          %s201 = int_to_ptr.vmem [resolvable:$true] %s200
          %206 = dma.hbm_to_vmem [thread:$0]  %s199, 64, %s201, %s189, 32, 32, 2
        $region20: #{tpu_custom_call.1} parent=15 // pred_fallthru
          _
        // Predicated region
        $region21: #{tpu_custom_call.1} parent=15 // pred_check
          %p207 = pneg %p82
        $region22: #{tpu_custom_call.1} parent=15 // pred_check_branch
          %209 = sbr.rel (%p207) target = $region24
        $region23: #{tpu_custom_call.1} parent=15 // pred_region
          %p210 = scmp.lt.s32.totalorder %s27, 1
          %s211 = scalar_select %p210, %s27, 1
          %p212 = scmp.lt.s32.totalorder %s28, 0
          %s213 = scalar_select %p212, %s28, 0
          %s214 = sadd.s32 %s213, %s211
          %s215 = scalar_lea.vmem %s1, %s214
        $region24: #{tpu_custom_call.1} parent=15 // pred_fallthru
          _
      $region16: #{tpu_custom_call.1} parent=5 // pred_fallthru
        _
      %p216 = scmp.le.s32.totalorder 1, %s20
      %p217 = scmp.lt.s32.totalorder %s20, 3
      %p218 = pnand %p216, %p217
      %p219 = pneg %p218
      // Predicated region
      $region25: #{tpu_custom_call.1} parent=5 // pred_check
        _
      $region26: #{tpu_custom_call.1} parent=5 // pred_check_branch
        %221 = sbr.rel (%p218) target = $region28
      $region27: #{tpu_custom_call.1} parent=5 // pred_region
        %s222 = ssub.s32 %s20, 1
        %s223 = sand.u32 %s47, 1
        %s224 = scalar_lea.sflag [#allocation3], %s223
        %s225 = sand.u32 %s47, 1
        %s226 = smul.addr %s225, 4
        %s227 = scalar_lea.vmem [#allocation2], %s226
        // Predicated region
        $region29: #{tpu_custom_call.1} parent=27 // pred_check
          %p228 = pneg %p60
        $region30: #{tpu_custom_call.1} parent=27 // pred_check_branch
          %230 = sbr.rel (%p228) target = $region32
        $region31: #{tpu_custom_call.1} parent=27 // pred_region
          %231 = dma.done %s224, 64
        $region32: #{tpu_custom_call.1} parent=27 // pred_fallthru
          _
        %s232 = sand.u32 %s47, 1
        %s233 = scalar_lea.sflag [#allocation3], %s232
        %s234 = sand.u32 %s47, 1
        %s235 = smul.addr %s234, 4
        %s236 = scalar_lea.vmem [#allocation2], %s235
        %p237 = pneg %p60
        %p238 = pneg %p57
        %p239 = scmp.lt.s32.totalorder %s29, 1
        %s240 = scalar_select %p239, %s29, 1
        %p241 = scmp.lt.s32.totalorder %s30, 0
        %s242 = scalar_select %p241, %s30, 0
        %s243 = sadd.s32 %s242, %s240
        %s244 = scalar_lea.vmem %s1, %s243
        %p245 = pneg %p88
        %p246 = pneg %p85
        %p247 = pneg %p114
        %p248 = pneg %p111
        %s249 = sand.u32 %s101, 1
        %s250 = scalar_lea.sflag [#allocation4], %s249
        %s251 = sand.u32 %s101, 1
        %s252 = scalar_lea.vmem [#allocation5], %s251
        %p253 = pneg %p140
        %p254 = pneg %p137
        %s255 = sand.u32 %s25, 1
        %s256 = scalar_lea.sflag [#allocation7], %s255
        %s257 = sand.u32 %s127, 1
        %s258 = scalar_lea.vmem [#allocation6], %s257
        %p259 = pneg %p166
        %p260 = pneg %p163
        %s261 = sand.u32 %s25, 1
        %s262 = scalar_lea.sflag [#allocation7], %s261
        %s263 = sand.u32 %s153, 1
        %s264 = scalar_lea.vmem [#allocation8], %s263
        %p265 = scmp.lt.s32.totalorder %s29, 1
        %s266 = scalar_select %p265, %s29, 1
        %p267 = scmp.lt.s32.totalorder %s30, 0
        %s268 = scalar_select %p267, %s30, 0
        %s269 = sadd.s32 %s268, %s266
        %s270 = scalar_lea.vmem %s1, %s269
        %p271 = scmp.eq.s32.totalorder %s30, 0
        // Predicated region
        $region33: #{tpu_custom_call.1} parent=27 // pred_check
          %p272 = pneg %p271
        $region34: #{tpu_custom_call.1} parent=27 // pred_check_branch
          %274 = sbr.rel (%p272) target = $region36
        $region35: #{tpu_custom_call.1} parent=27 // pred_region
          %275 = vst [vmem:[%s252] sm:$0x1] 0.0
          %276 = vst [vmem:[%s258] sm:$0x1] 0.0
          %277 = vst [vmem:[%s264] sm:$0x1] 0.0
        $region36: #{tpu_custom_call.1} parent=27 // pred_fallthru
          _
        %v278 = vld [vmem:[%s227] sm:$0x3]
        %s279 = scalar_lea.vmem %s227, 2 [#allocation2]
        %v280 = vld [vmem:[%s279] sm:$0x3]
        %v281 = vld [vmem:[%s270] sm:$0x1]
        %v282 = vunpack.c.0.s8 %v281
        %vm283 = vcmp.eq.s32.totalorder %v282, 1
        %v284 = vsub.f32 %v280, %v278
        %v285 = vsub.f32 0.0, %v284
        %v286 = vsel %vm283, %v285, %v284
        %v287 = vand.u32 2147483647, %v284
        %v288 = vsub.f32 0.0, %v287
        %v289 = vmul.f32 %v288, 1.442695
        %v290 = vpow.pop %v289
        %v291 = vadd.f32 %v290, 1.0
        %v292 = vmax.f32 %v286, 0.0
        %v293 = vlog2.pop %v291
        %v294 = vmul.f32 %v293, 0.6931472
        %v295 = vadd.f32 %v292, %v294
        %v296 = vrcp.pop %v291
        %v297 = vmul.f32 %v291, %v296
        %v298 = vsub.f32 2.0, %v297
        %v299 = vmul.f32 %v296, %v298
        %vm300 = vcmp.ge.f32.partialorder %v284, 0.0
        %v301 = vsub.f32 1.0, %v299
        %v302 = vsel %vm300, %v299, %v301
        %v303 = vsel %vm283, 1.0, 0.0
        %v304 = vsel %vm283, %v302, 0.0
        %v305 = vadd.f32 %v302, %v303
        %v306 = vld [vmem:[%s252] sm:$0x1]
        %vm307 = vcmask 1041408
        %v308 = vsel %vm307, %v295, 0.0
        %v309 = vrot.slane %v308, 4
        %v310 = vadd.f32 %v308, %v309
        %v311 = vrot.slane %v310, 2
        %v312 = vadd.f32 %v310, %v311
        %v313 = vrot.slane %v312, 1
        %v314 = vadd.f32 %v312, %v313
        %v315 = vadd.f32 %v306, %v314
        %316 = vst [vmem:[%s252] sm:$0x1] %v315
        %v317 = vld [vmem:[%s258] sm:$0x1]
        %v318 = vsel %vm307, %v304, 0.0
        %v319 = vrot.slane %v318, 4
        %v320 = vadd.f32 %v318, %v319
        %v321 = vrot.slane %v320, 2
        %v322 = vadd.f32 %v320, %v321
        %v323 = vrot.slane %v322, 1
        %v324 = vadd.f32 %v322, %v323
        %v325 = vadd.f32 %v317, %v324
        %326 = vst [vmem:[%s258] sm:$0x1] %v325
        %v327 = vld [vmem:[%s264] sm:$0x1]
        %v328 = vsel %vm307, %v305, 0.0
        %v329 = vrot.slane %v328, 4
        %v330 = vadd.f32 %v328, %v329
        %v331 = vrot.slane %v330, 2
        %v332 = vadd.f32 %v330, %v331
        %v333 = vrot.slane %v332, 1
        %v334 = vadd.f32 %v332, %v333
        %v335 = vadd.f32 %v327, %v334
        %336 = vst [vmem:[%s264] sm:$0x1] %v335
        %s337 = sand.u32 %s101, 1
        %s338 = scalar_lea.sflag [#allocation4], %s337
        %s339 = sand.u32 %s101, 1
        %s340 = scalar_lea.vmem [#allocation5], %s339
        %s341 = sand.u32 %s25, 1
        %s342 = scalar_lea.sflag [#allocation7], %s341
        %s343 = sand.u32 %s127, 1
        %s344 = scalar_lea.vmem [#allocation6], %s343
        %s345 = sand.u32 %s25, 1
        %s346 = scalar_lea.sflag [#allocation7], %s345
        %s347 = sand.u32 %s153, 1
        %s348 = scalar_lea.vmem [#allocation8], %s347
        // Predicated region
        $region37: #{tpu_custom_call.1} parent=27 // pred_check
          %p349 = pneg %p111
        $region38: #{tpu_custom_call.1} parent=27 // pred_check_branch
          %351 = sbr.rel (%p349) target = $region40
        $region39: #{tpu_custom_call.1} parent=27 // pred_region
          %s353 = ssub.s32 16, 16
          %354 = vsyncadd %s338, %s353
          %s355 = smul.addr %s29, 16
          %s356 = scalar_lea.hbm %s2, %s355
          %s358 = sshll.u32 %s340, 4
          %s359 = int_to_ptr.vmem [resolvable:$true] %s358
          %361 = dma.vmem_to_hbm [thread:$0]  %s359, 16, %s356, %s338
        $region40: #{tpu_custom_call.1} parent=27 // pred_fallthru
          _
        // Predicated region
        $region41: #{tpu_custom_call.1} parent=27 // pred_check
          %p362 = pneg %p137
        $region42: #{tpu_custom_call.1} parent=27 // pred_check_branch
          %364 = sbr.rel (%p362) target = $region44
        $region43: #{tpu_custom_call.1} parent=27 // pred_region
          %s366 = ssub.s32 16, 16
          %367 = vsyncadd %s342, %s366
          %s368 = smul.addr %s29, 16
          %s369 = scalar_lea.hbm %s3, %s368
          %s371 = sshll.u32 %s344, 4
          %s372 = int_to_ptr.vmem [resolvable:$true] %s371
          %374 = dma.vmem_to_hbm [thread:$0]  %s372, 16, %s369, %s342
        $region44: #{tpu_custom_call.1} parent=27 // pred_fallthru
          _
        // Predicated region
        $region45: #{tpu_custom_call.1} parent=27 // pred_check
          %p375 = pneg %p163
        $region46: #{tpu_custom_call.1} parent=27 // pred_check_branch
          %377 = sbr.rel (%p375) target = $region48
        $region47: #{tpu_custom_call.1} parent=27 // pred_region
          %s379 = ssub.s32 16, 16
          %380 = vsyncadd %s346, %s379
          %s381 = smul.addr %s29, 16
          %s382 = scalar_lea.hbm %s4, %s381
          %s384 = sshll.u32 %s348, 4
          %s385 = int_to_ptr.vmem [resolvable:$true] %s384
          %387 = dma.vmem_to_hbm [thread:$0]  %s385, 16, %s382, %s346
        $region48: #{tpu_custom_call.1} parent=27 // pred_fallthru
          _
      $region28: #{tpu_custom_call.1} parent=5 // pred_fallthru
        _
      %p388 = scmp.le.s32.totalorder 2, %s20
      // Predicated region
      $region49: #{tpu_custom_call.1} parent=5 // pred_check
        %p389 = pneg %p388
      $region50: #{tpu_custom_call.1} parent=5 // pred_check_branch
        %391 = sbr.rel (%p389) target = $region52
      $region51: #{tpu_custom_call.1} parent=5 // pred_region
        %s392 = ssub.s32 %s20, 2
        // Predicated region
        $region53: #{tpu_custom_call.1} parent=51 // pred_check
          %p393 = pneg %p117
        $region54: #{tpu_custom_call.1} parent=51 // pred_check_branch
          %395 = sbr.rel (%p393) target = $region56
        $region55: #{tpu_custom_call.1} parent=51 // pred_region
          %s396 = sand.u32 %s102, 1
          %s397 = scalar_lea.sflag [#allocation4], %s396
          %s398 = sand.u32 %s102, 1
          %s399 = scalar_lea.vmem [#allocation5], %s398
          %400 = dma.done %s397, 16
        $region56: #{tpu_custom_call.1} parent=51 // pred_fallthru
          _
        // Predicated region
        $region57: #{tpu_custom_call.1} parent=51 // pred_check
          %p401 = pneg %p143
        $region58: #{tpu_custom_call.1} parent=51 // pred_check_branch
          %403 = sbr.rel (%p401) target = $region60
        $region59: #{tpu_custom_call.1} parent=51 // pred_region
          %s404 = sand.u32 %s26, 1
          %s405 = scalar_lea.sflag [#allocation7], %s404
          %s406 = sand.u32 %s128, 1
          %s407 = scalar_lea.vmem [#allocation6], %s406
          %408 = dma.done %s405, 16
        $region60: #{tpu_custom_call.1} parent=51 // pred_fallthru
          _
        // Predicated region
        $region61: #{tpu_custom_call.1} parent=51 // pred_check
          %p409 = pneg %p169
        $region62: #{tpu_custom_call.1} parent=51 // pred_check_branch
          %411 = sbr.rel (%p409) target = $region64
        $region63: #{tpu_custom_call.1} parent=51 // pred_region
          %s412 = sand.u32 %s26, 1
          %s413 = scalar_lea.sflag [#allocation7], %s412
          %s414 = sand.u32 %s154, 1
          %s415 = scalar_lea.vmem [#allocation8], %s414
          %416 = dma.done %s413, 16
        $region64: #{tpu_custom_call.1} parent=51 // pred_fallthru
          _
      $region52: #{tpu_custom_call.1} parent=5 // pred_fallthru
        _
    $region6: #{tpu_custom_call.1} parent=1 // loop_footer
      %s24 = sadd.s32 1, %s20
    $region7: #{tpu_custom_call.1} parent=1 // loop_footer_branch
      %19 = sbr.rel target = $region3
    $region8: #{tpu_custom_call.1} parent=1 // loop_exit
      _
    %417 = vsyncpa [#allocation3], 1
    %s418 = scalar_lea.sflag [#allocation3], 1
    %419 = vsyncpa %s418, 1
    %420 = vsyncpa [#allocation4], 1
    %s421 = scalar_lea.sflag [#allocation4], 1
    %422 = vsyncpa %s421, 1
    %423 = vsyncpa [#allocation7], 1
    %s424 = scalar_lea.sflag [#allocation7], 1
    %425 = vsyncpa %s424, 1

</llo_original>
